<compile_context>
chip_gen: v5e
topology: v5e:2x2
jax: 0.10.0
libtpu: 0.0.40
codegen_flags: <defaults>
</compile_context>

<pallas_src>
import functools

import jax
import jax.numpy as jnp
from jax import lax
from jax.experimental import pallas as pl
from jax.experimental.pallas import tpu as pltpu


def _round_up(n, m):
    return ((n + m - 1) // m) * m


def _device_budgets():
    """(per-step f32 feature-tile budget, vmem_limit_bytes, x buffer count)."""
    kind = ""
    try:
        kind = jax.devices()[0].device_kind.lower()
    except Exception:
        pass
    if "v5" in kind:
        # 128 MiB VMEM but lowest HBM BW: big tiles + deeper x prefetch.
        return 16 << 20, 64 << 20, 3
    if "v6" in kind:
        # 128 MiB VMEM: big tiles amortize per-step pipeline overhead.
        return 16 << 20, 64 << 20, 2
    # v7x-class (64 MiB VMEM) and unknown chips: stay conservative.
    return 10 << 20, 48 << 20, 2


def _pick_batch_tile(B):
    # Block second-minor dims must be a multiple of 8 or the full dim, so use
    # the full batch when B <= 8 and 8-row tiles (ragged handled by cdiv +
    # dropped OOB writes) otherwise.
    return B if B <= 8 else 8


def _pick_spatial_tile(S, Fp, budget_bytes):
    """Spatial tile: full S if it fits the budget, else the largest multiple
    of 128 within the per-step f32 feature-tile budget (preferring an exact
    divisor of S so no masked last block is needed)."""
    max_ts = (budget_bytes // (Fp * 4)) // 128 * 128
    max_ts = max(128, min(max_ts, 8192))
    if S <= max_ts:
        return S
    for t in range(max_ts, 127, -128):
        if S % t == 0:
            return t
    return max_ts          # ragged: last block masked inside the kernel


def _iic_kernel(x_ref, wc_ref, bc_ref, wh_ref, bh_ref,
                out_ref, out_over_ref, feat_ref, acc_ref,
                *, activate, nc, nco, hp, s_total, ts):
    # x_ref  : [tB, C, tS] f32  (native NCHW block: channels on sublanes,
    #                            spatial positions on the 128-lane axis)
    # wc_ref : [C, Fp]     f32  1x1 conv weight (Fp = padded num_features)
    # bc_ref : [1, Fp]     f32
    # wh_ref : [Fp, 2*hp]  f32  fc | fc_over fused, each padded to hp lanes
    # bh_ref : [1, 2*hp]   f32
    # acc_ref: [tB, Fp]    f32  running spatial sum of ReLU(conv) features
    j = pl.program_id(1)

    @pl.when(j == 0)
    def _init():
        acc_ref[...] = jnp.zeros_like(acc_ref)

    tB, _, tS = x_ref.shape
    wc = wc_ref[...]
    bc = bc_ref[...]

    ragged = (s_total % ts) != 0
    if ragged:
        # Mask spatial positions past S: ReLU(pad*W + b) != 0, so padded
        # columns must not reach the pooled sum.
        col = jax.lax.broadcasted_iota(jnp.int32, (tS, 1), 0) + j * ts
        valid = col < s_total

    for b in range(tB):                     # tB <= 8, static unroll
        # (C, tS)^T . (C, Fp) -> (tS, Fp): contract the channel dim of both
        # operands (no reshape / no explicit transpose materialized).
        fb = lax.dot_general(x_ref[b], wc,
                             dimension_numbers=(((0,), (0,)), ((), ())),
                             preferred_element_type=jnp.float32)
        fb = jnp.maximum(fb + bc, 0.0)      # bias + ReLU (f32)
        if ragged:
            fb = jnp.where(valid, fb, 0.0)
        # Sublane reduce over spatial -> (1, Fp) row, lane-aligned with acc.
        acc_ref[b:b + 1, :] += jnp.sum(fb, axis=0, keepdims=True)

    # --- finalize (pool mean + heads + activation) on the last spatial tile -
    @pl.when(j == pl.num_programs(1) - 1)
    def _finalize():
        feats = acc_ref[...] * (1.0 / s_total)        # global average pool
        feat_ref[...] = feats

        logits = jnp.dot(feats, wh_ref[...],
                         preferred_element_type=jnp.float32) + bh_ref[...]
        l1 = logits[:, :hp]         # fc head block (lane-dense, padded to hp)
        l2 = logits[:, hp:]         # fc_over head block

        if activate:
            if nc > 1:
                colh = jax.lax.broadcasted_iota(jnp.int32, (tB, hp), 1)

                def _masked_softmax(z, n_valid):
                    z = jnp.where(colh < n_valid, z, -1e30)
                    m = jnp.max(z, axis=-1, keepdims=True)
                    e = jnp.exp(z - m)
                    return e / jnp.sum(e, axis=-1, keepdims=True)

                l1 = _masked_softmax(l1, nc)
                l2 = _masked_softmax(l2, nco)
            else:
                l1 = jax.nn.sigmoid(l1)
                l2 = jax.nn.sigmoid(l2)

        out_ref[...] = l1
        out_over_ref[...] = l2


@functools.partial(jax.jit, static_argnames=("activate", "with_features"))
def iic_forward(x_nchw, params, *, activate=False, with_features=False):
    """Pallas implementation of IICModel.forward.

    x_nchw: [B, C, H, W] float32 (PyTorch NCHW convention).
    Returns (x, x_over) or (x, x_over, features) like the PyTorch module.
    """
    wc, bc, wfc, bfc, wov, bov = (params[k] for k in
                                  ('wc', 'bc', 'wfc', 'bfc', 'wov', 'bov'))
    B, C, H, W = x_nchw.shape
    S = H * W
    F = wc.shape[1]
    NC = wfc.shape[1]
    NCO = wov.shape[1]

    Fp = _round_up(F, 128)                  # padded num_features (lane-dense)
    HP = _round_up(max(NC, NCO), 128)       # padded per-head width

    # --- pad / fuse parameters (zero padding keeps results exact), all f32 --
    wc_p = jnp.zeros((C, Fp), jnp.float32).at[:, :F].set(wc)
    bc_p = jnp.zeros((1, Fp), jnp.float32).at[:, :F].set(bc.reshape(1, -1))
    wh = jnp.zeros((Fp, 2 * HP), jnp.float32)
    wh = wh.at[:F, :NC].set(wfc).at[:F, HP:HP + NCO].set(wov)
    bh = jnp.zeros((1, 2 * HP), jnp.float32)
    bh = bh.at[:, :NC].set(bfc.reshape(1, -1))
    bh = bh.at[:, HP:HP + NCO].set(bov.reshape(1, -1))

    # Native NCHW streaming: a free reshape (no transpose / dtype pass).
    x = x_nchw.reshape(B, C, S)

    fmap_budget, vmem_limit, x_buffers = _device_budgets()
    tB = _pick_batch_tile(B)
    tS = _pick_spatial_tile(S, Fp, fmap_budget)
    grid = (pl.cdiv(B, tB), pl.cdiv(S, tS))

    kernel = functools.partial(_iic_kernel, activate=activate,
                               nc=NC, nco=NCO, hp=HP, s_total=S, ts=tS)

    # x spec: lane-dense spatial minor axis; deeper prefetch on v5e.
    if x_buffers == 2:
        x_spec = pl.BlockSpec((tB, C, tS), lambda i, j: (i, 0, j))
    else:
        x_spec = pl.BlockSpec((tB, C, tS), lambda i, j: (i, 0, j),
                              pipeline_mode=pl.Buffered(x_buffers))

    def _const_spec(shape):
        # Constant-index operands: single-buffered (no pointless double buffer).
        return pl.BlockSpec(shape, lambda i, j: (0,) * len(shape),
                            pipeline_mode=pl.Buffered(1))

    cost = pl.CostEstimate(
        flops=2 * B * S * C * F + 2 * B * F * (NC + NCO),
        transcendentals=(B * (NC + NCO)) if activate else 0,
        bytes_accessed=(B * C * S + C * Fp + Fp + Fp * 2 * HP + 2 * HP
                        + 2 * B * HP + B * Fp) * 4)

    out1, out2, feats = pl.pallas_call(
        kernel,
        out_shape=(
            jax.ShapeDtypeStruct((B, HP), jnp.float32),   # fc head (padded)
            jax.ShapeDtypeStruct((B, HP), jnp.float32),   # fc_over head
            jax.ShapeDtypeStruct((B, Fp), jnp.float32),   # features (padded)
        ),
        grid=grid,
        in_specs=[
            x_spec,                                        # x stream (NCHW)
            _const_spec((C, Fp)),                          # conv weight
            _const_spec((1, Fp)),                          # conv bias
            _const_spec((Fp, 2 * HP)),                     # fused heads W
            _const_spec((1, 2 * HP)),                      # fused heads b
        ],
        out_specs=(
            pl.BlockSpec((tB, HP), lambda i, j: (i, 0)),
            pl.BlockSpec((tB, HP), lambda i, j: (i, 0)),
            pl.BlockSpec((tB, Fp), lambda i, j: (i, 0)),
        ),
        scratch_shapes=[pltpu.VMEM((tB, Fp), jnp.float32)],    # pool accum
        compiler_params=pltpu.CompilerParams(
            dimension_semantics=("parallel", "arbitrary"),
            vmem_limit_bytes=vmem_limit),
        cost_estimate=cost,
    )(x, wc_p, bc_p, wh, bh)

    out = out1[:, :NC]
    out_over = out2[:, :NCO]
    if with_features:
        return out, out_over, feats[:, :F]
    return out, out_over


def init_params(key, in_channels, num_features, num_classes, num_classes_over):
    """Deterministic parameter init (uniform(-1/sqrt(fan_in), 1/sqrt(fan_in)),
    mirroring nn.Linear / nn.Conv2d defaults)."""
    ks = jax.random.split(key, 6)

    def _u(k, shape, fan_in):
        bound = 1.0 / jnp.sqrt(jnp.float32(fan_in))
        return jax.random.uniform(k, shape, jnp.float32, -bound, bound)

    return {
        'wc':  _u(ks[0], (in_channels, num_features), in_channels),
        'bc':  _u(ks[1], (num_features,), in_channels),
        'wfc': _u(ks[2], (num_features, num_classes), num_features),
        'bfc': _u(ks[3], (num_classes,), num_features),
        'wov': _u(ks[4], (num_features, num_classes_over), num_features),
        'bov': _u(ks[5], (num_classes_over,), num_features),
    }


def _reference(x_nchw, params, *, activate, with_features):
    """Pure-JAX reference with identical semantics (for correctness checks)."""
    wc, bc, wfc, bfc, wov, bov = (params[k] for k in
                                  ('wc', 'bc', 'wfc', 'bfc', 'wov', 'bov'))
    B, C, H, W = x_nchw.shape
    xs = x_nchw.reshape(B, C, H * W)
    fmap = jnp.maximum(jnp.einsum('bcs,cf->bsf', xs, wc) + bc, 0.0)
    feats = jnp.mean(fmap, axis=1)
    out = feats @ wfc + bfc
    out_over = feats @ wov + bov
    if activate:
        if wfc.shape[1] > 1:
            out = jax.nn.softmax(out, axis=-1)
            out_over = jax.nn.softmax(out_over, axis=-1)
        else:
            out = jax.nn.sigmoid(out)
            out_over = jax.nn.sigmoid(out_over)
    if with_features:
        return out, out_over, feats
    return out, out_over


if __name__ == "__main__":
    B, C, H, W = 2, 4, 16, 16
    NUM_FEATURES = 32
    NUM_CLASSES = 5
    NUM_CLASSES_OVER = 8

    key = jax.random.PRNGKey(0)
    kx, kp = jax.random.split(key)
    x = jax.random.normal(kx, (B, C, H, W), jnp.float32)
    params = init_params(kp, C, NUM_FEATURES, NUM_CLASSES, NUM_CLASSES_OVER)

    # Full forward: activated heads + features, like
    # model(x, activate=True, with_feautres=True).
    out, out_over, feats = iic_forward(x, params, activate=True,
                                       with_features=True)
    jax.block_until_ready((out, out_over, feats))

    assert out.shape == (B, NUM_CLASSES)
    assert out_over.shape == (B, NUM_CLASSES_OVER)
    assert feats.shape == (B, NUM_FEATURES)
    # Softmax rows sum to ~1 (padded logit columns are masked before softmax).
    assert jnp.allclose(jnp.sum(out, axis=-1), 1.0, atol=1e-4)
    assert jnp.allclose(jnp.sum(out_over, axis=-1), 1.0, atol=1e-4)

    # Match the pure-JAX reference (loose tol: MXU default f32 matmul precision).
    r_out, r_over, r_feats = _reference(x, params, activate=True,
                                        with_features=True)
    assert jnp.allclose(out, r_out, atol=2e-2)
    assert jnp.allclose(out_over, r_over, atol=2e-2)
    assert jnp.allclose(feats, r_feats, atol=2e-2)

    # Default (non-activated) path: model(x)
    logits, logits_over = iic_forward(x, params, activate=False,
                                      with_features=False)
    jax.block_until_ready((logits, logits_over))
    r_logits, r_logits_over = _reference(x, params, activate=False,
                                         with_features=False)
    assert jnp.allclose(logits, r_logits, atol=2e-2)
    assert jnp.allclose(logits_over, r_logits_over, atol=2e-2)

    print("KERNEL_OK")
</pallas_src>

<mosaic_0001>
module attributes {stable_mosaic.version = 11 : i64} {
  func.func @_iic_kernel(%arg0: i32, %arg1: i32, %arg2: memref<2x4x256xf32, #tpu.memory_space<vmem>>, %arg3: memref<4x128xf32, #tpu.memory_space<vmem>>, %arg4: memref<1x128xf32, #tpu.memory_space<vmem>>, %arg5: memref<128x256xf32, #tpu.memory_space<vmem>>, %arg6: memref<1x256xf32, #tpu.memory_space<vmem>>, %arg7: memref<2x128xf32, #tpu.memory_space<vmem>>, %arg8: memref<2x128xf32, #tpu.memory_space<vmem>>, %arg9: memref<2x128xf32, #tpu.memory_space<vmem>>, %arg10: memref<2x128xf32, #tpu.memory_space<vmem>>) attributes {dimension_semantics = [#tpu.dimension_semantics<parallel>, #tpu.dimension_semantics<arbitrary>], iteration_bounds = array<i64: 1, 1>, scalar_prefetch = 0 : i64, scratch_operands = 1 : i64, tpu.core_type = #tpu.core_type<tc>, window_params = [{transform_indices = @transform_0, window_bounds = array<i64: 2, 4, 256>}, {pipeline_mode = #tpu.pipeline_mode<synchronous>, transform_indices = @transform_1, window_bounds = array<i64: 4, 128>}, {pipeline_mode = #tpu.pipeline_mode<synchronous>, transform_indices = @transform_2, window_bounds = array<i64: 1, 128>}, {pipeline_mode = #tpu.pipeline_mode<synchronous>, transform_indices = @transform_3, window_bounds = array<i64: 128, 256>}, {pipeline_mode = #tpu.pipeline_mode<synchronous>, transform_indices = @transform_4, window_bounds = array<i64: 1, 256>}, {transform_indices = @transform_5, window_bounds = array<i64: 2, 128>}, {transform_indices = @transform_6, window_bounds = array<i64: 2, 128>}, {transform_indices = @transform_7, window_bounds = array<i64: 2, 128>}]} {
    %c0_i32 = arith.constant 0 : i32
    %0 = arith.cmpi eq, %arg1, %c0_i32 : i32
    %1 = arith.extui %0 : i1 to i32
    %c0_i32_0 = arith.constant 0 : i32
    %2 = arith.cmpi ne, %1, %c0_i32_0 : i32
    scf.if %2 {
      %cst_24 = arith.constant 0.000000e+00 : f32
      %32 = vector.broadcast %cst_24 : f32 to vector<2x128xf32>
      %c0_25 = arith.constant 0 : index
      %c0_26 = arith.constant 0 : index
      %33 = vector.load %arg10[%c0_25, %c0_26] : memref<2x128xf32, #tpu.memory_space<vmem>>, vector<2x128xf32>
      tpu.vector_store %arg10[%c0_25, %c0_26], %32 {strides = array<i32>} : memref<2x128xf32, #tpu.memory_space<vmem>>, vector<2x128xf32>,
    } else {
    }
    %c0 = arith.constant 0 : index
    %c0_1 = arith.constant 0 : index
    %3 = vector.load %arg3[%c0, %c0_1] : memref<4x128xf32, #tpu.memory_space<vmem>>, vector<4x128xf32>
    %c0_2 = arith.constant 0 : index
    %c0_3 = arith.constant 0 : index
    %4 = vector.load %arg4[%c0_2, %c0_3] : memref<1x128xf32, #tpu.memory_space<vmem>>, vector<1x128xf32>
    %c0_4 = arith.constant 0 : index
    %c0_5 = arith.constant 0 : index
    %c0_6 = arith.constant 0 : index
    %5 = vector.load %arg2[%c0_4, %c0_5, %c0_6] : memref<2x4x256xf32, #tpu.memory_space<vmem>>, vector<1x4x256xf32>
    %6 = vector.shape_cast %5 : vector<1x4x256xf32> to vector<4x256xf32>
    %cst = arith.constant dense<0.000000e+00> : vector<256x128xf32>
    %7 = tpu.matmul %6, %3, %cst {dimension_numbers = #tpu.dot_dimension_numbers<[0], [0], [1], [1], [0, 1, 1, 1], [], []>} : vector<4x256xf32>, vector<4x128xf32>, vector<256x128xf32> -> vector<256x128xf32>
    %8 = vector.broadcast %4 : vector<1x128xf32> to vector<256x128xf32>
    %9 = arith.addf %7, %8 : vector<256x128xf32>
    %cst_7 = arith.constant 0.000000e+00 : f32
    %10 = vector.broadcast %cst_7 : f32 to vector<256x128xf32>
    %11 = arith.maximumf %9, %10 : vector<256x128xf32>
    %c0_8 = arith.constant 0 : index
    %c0_9 = arith.constant 0 : index
    %12 = vector.load %arg10[%c0_8, %c0_9] : memref<2x128xf32, #tpu.memory_space<vmem>>, vector<1x128xf32>
    %cst_10 = arith.constant dense<0.000000e+00> : vector<128xf32>
    %13 = vector.multi_reduction <add>, %11, %cst_10 [0] : vector<256x128xf32> to vector<128xf32>
    %14 = vector.shape_cast %13 : vector<128xf32> to vector<1x128xf32>
    %15 = arith.addf %12, %14 : vector<1x128xf32>
    %c0_11 = arith.constant 0 : index
    %c0_12 = arith.constant 0 : index
    %16 = vector.load %arg10[%c0_11, %c0_12] : memref<2x128xf32, #tpu.memory_space<vmem>>, vector<1x128xf32>
    tpu.vector_store %arg10[%c0_11, %c0_12], %15 {strides = array<i32>} : memref<2x128xf32, #tpu.memory_space<vmem>>, vector<1x128xf32>,
    %c1 = arith.constant 1 : index
    %c0_13 = arith.constant 0 : index
    %c0_14 = arith.constant 0 : index
    %17 = vector.load %arg2[%c1, %c0_13, %c0_14] : memref<2x4x256xf32, #tpu.memory_space<vmem>>, vector<1x4x256xf32>
    %18 = vector.shape_cast %17 : vector<1x4x256xf32> to vector<4x256xf32>
    %cst_15 = arith.constant dense<0.000000e+00> : vector<256x128xf32>
    %19 = tpu.matmul %18, %3, %cst_15 {dimension_numbers = #tpu.dot_dimension_numbers<[0], [0], [1], [1], [0, 1, 1, 1], [], []>} : vector<4x256xf32>, vector<4x128xf32>, vector<256x128xf32> -> vector<256x128xf32>
    %20 = vector.broadcast %4 : vector<1x128xf32> to vector<256x128xf32>
    %21 = arith.addf %19, %20 : vector<256x128xf32>
    %cst_16 = arith.constant 0.000000e+00 : f32
    %22 = vector.broadcast %cst_16 : f32 to vector<256x128xf32>
    %23 = arith.maximumf %21, %22 : vector<256x128xf32>
    %c1_17 = arith.constant 1 : index
    %c0_18 = arith.constant 0 : index
    %24 = vector.load %arg10[%c1_17, %c0_18] : memref<2x128xf32, #tpu.memory_space<vmem>>, vector<1x128xf32>
    %cst_19 = arith.constant dense<0.000000e+00> : vector<128xf32>
    %25 = vector.multi_reduction <add>, %23, %cst_19 [0] : vector<256x128xf32> to vector<128xf32>
    %26 = vector.shape_cast %25 : vector<128xf32> to vector<1x128xf32>
    %27 = arith.addf %24, %26 : vector<1x128xf32>
    %c1_20 = arith.constant 1 : index
    %c0_21 = arith.constant 0 : index
    %28 = vector.load %arg10[%c1_20, %c0_21] : memref<2x128xf32, #tpu.memory_space<vmem>>, vector<1x128xf32>
    tpu.vector_store %arg10[%c1_20, %c0_21], %27 {strides = array<i32>} : memref<2x128xf32, #tpu.memory_space<vmem>>, vector<1x128xf32>,
    %c0_i32_22 = arith.constant 0 : i32
    %29 = arith.cmpi eq, %arg1, %c0_i32_22 : i32
    %30 = arith.extui %29 : i1 to i32
    %c0_i32_23 = arith.constant 0 : i32
    %31 = arith.cmpi ne, %30, %c0_i32_23 : i32
    scf.if %31 {
      %c0_24 = arith.constant 0 : index
      %c0_25 = arith.constant 0 : index
      %32 = vector.load %arg10[%c0_24, %c0_25] : memref<2x128xf32, #tpu.memory_space<vmem>>, vector<2x128xf32>
      %cst_26 = arith.constant 3.906250e-03 : f32
      %33 = vector.broadcast %cst_26 : f32 to vector<2x128xf32>
      %34 = arith.mulf %32, %33 : vector<2x128xf32>
      %c0_27 = arith.constant 0 : index
      %c0_28 = arith.constant 0 : index
      %35 = vector.load %arg9[%c0_27, %c0_28] : memref<2x128xf32, #tpu.memory_space<vmem>>, vector<2x128xf32>
      tpu.vector_store %arg9[%c0_27, %c0_28], %34 {strides = array<i32>} : memref<2x128xf32, #tpu.memory_space<vmem>>, vector<2x128xf32>,
      %c0_29 = arith.constant 0 : index
      %c0_30 = arith.constant 0 : index
      %36 = vector.load %arg5[%c0_29, %c0_30] : memref<128x256xf32, #tpu.memory_space<vmem>>, vector<128x256xf32>
      %cst_31 = arith.constant dense<0.000000e+00> : vector<2x256xf32>
      %37 = tpu.matmul %34, %36, %cst_31 {dimension_numbers = #tpu.dot_dimension_numbers<[1], [0], [0], [1], [0, 0, 1, 1], [], []>} : vector<2x128xf32>, vector<128x256xf32>, vector<2x256xf32> -> vector<2x256xf32>
      %c0_32 = arith.constant 0 : index
      %c0_33 = arith.constant 0 : index
      %38 = vector.load %arg6[%c0_32, %c0_33] : memref<1x256xf32, #tpu.memory_space<vmem>>, vector<1x256xf32>
      %39 = vector.broadcast %38 : vector<1x256xf32> to vector<2x256xf32>
      %40 = arith.addf %37, %39 : vector<2x256xf32>
      %41 = vector.extract_strided_slice %40 {offsets = [0, 0], sizes = [2, 128], strides = [1, 1]} : vector<2x256xf32> to vector<2x128xf32>
      %42 = vector.extract_strided_slice %40 {offsets = [0, 128], sizes = [2, 128], strides = [1, 1]} : vector<2x256xf32> to vector<2x128xf32>
      %43 = tpu.iota {dimensions = array<i32: 1>} : vector<2x128xi32>
      %c5_i32 = arith.constant 5 : i32
      %44 = vector.broadcast %c5_i32 : i32 to vector<2x128xi32>
      %45 = arith.cmpi slt, %43, %44 : vector<2x128xi32>
      %cst_34 = arith.constant -1.000000e+30 : f32
      %46 = vector.broadcast %cst_34 : f32 to vector<2x128xf32>
      %47 = arith.select %45, %41, %46 : vector<2x128xi1>, vector<2x128xf32>
      %cst_35 = arith.constant dense<0xFF800000> : vector<2xf32>
      %48 = vector.multi_reduction <maximumf>, %47, %cst_35 [1] : vector<2x128xf32> to vector<2xf32>
      %49 = vector.shape_cast %48 : vector<2xf32> to vector<2x1xf32>
      %50 = vector.broadcast %49 : vector<2x1xf32> to vector<2x128xf32>
      %51 = arith.subf %47, %50 : vector<2x128xf32>
      %52 = math.exp %51 : vector<2x128xf32>
      %cst_36 = arith.constant dense<0.000000e+00> : vector<2xf32>
      %53 = vector.multi_reduction <add>, %52, %cst_36 [1] : vector<2x128xf32> to vector<2xf32>
      %54 = vector.shape_cast %53 : vector<2xf32> to vector<2x1xf32>
      %55 = vector.broadcast %54 : vector<2x1xf32> to vector<2x128xf32>
      %56 = arith.divf %52, %55 : vector<2x128xf32>
      %c8_i32 = arith.constant 8 : i32
      %57 = vector.broadcast %c8_i32 : i32 to vector<2x128xi32>
      %58 = arith.cmpi slt, %43, %57 : vector<2x128xi32>
      %cst_37 = arith.constant -1.000000e+30 : f32
      %59 = vector.broadcast %cst_37 : f32 to vector<2x128xf32>
      %60 = arith.select %58, %42, %59 : vector<2x128xi1>, vector<2x128xf32>
      %cst_38 = arith.constant dense<0xFF800000> : vector<2xf32>
      %61 = vector.multi_reduction <maximumf>, %60, %cst_38 [1] : vector<2x128xf32> to vector<2xf32>
      %62 = vector.shape_cast %61 : vector<2xf32> to vector<2x1xf32>
      %63 = vector.broadcast %62 : vector<2x1xf32> to vector<2x128xf32>
      %64 = arith.subf %60, %63 : vector<2x128xf32>
      %65 = math.exp %64 : vector<2x128xf32>
      %cst_39 = arith.constant dense<0.000000e+00> : vector<2xf32>
      %66 = vector.multi_reduction <add>, %65, %cst_39 [1] : vector<2x128xf32> to vector<2xf32>
      %67 = vector.shape_cast %66 : vector<2xf32> to vector<2x1xf32>
      %68 = vector.broadcast %67 : vector<2x1xf32> to vector<2x128xf32>
      %69 = arith.divf %65, %68 : vector<2x128xf32>
      %c0_40 = arith.constant 0 : index
      %c0_41 = arith.constant 0 : index
      %70 = vector.load %arg7[%c0_40, %c0_41] : memref<2x128xf32, #tpu.memory_space<vmem>>, vector<2x128xf32>
      tpu.vector_store %arg7[%c0_40, %c0_41], %56 {strides = array<i32>} : memref<2x128xf32, #tpu.memory_space<vmem>>, vector<2x128xf32>,
      %c0_42 = arith.constant 0 : index
      %c0_43 = arith.constant 0 : index
      %71 = vector.load %arg8[%c0_42, %c0_43] : memref<2x128xf32, #tpu.memory_space<vmem>>, vector<2x128xf32>
      tpu.vector_store %arg8[%c0_42, %c0_43], %69 {strides = array<i32>} : memref<2x128xf32, #tpu.memory_space<vmem>>, vector<2x128xf32>,
    } else {
    }
    return
  }
  func.func @transform_0(%arg0: i32, %arg1: i32) -> (i32, i32, i32) {
    %c0_i32 = arith.constant 0 : i32
    %c0_i32_0 = arith.constant 0 : i32
    return %arg0, %c0_i32, %arg1 : i32, i32, i32
  }
  func.func @transform_1(%arg0: i32, %arg1: i32) -> (i32, i32) {
    %c0_i32 = arith.constant 0 : i32
    %c0_i32_0 = arith.constant 0 : i32
    %c0_i32_1 = arith.constant 0 : i32
    return %c0_i32, %c0_i32_0 : i32, i32
  }
  func.func @transform_2(%arg0: i32, %arg1: i32) -> (i32, i32) {
    %c0_i32 = arith.constant 0 : i32
    %c0_i32_0 = arith.constant 0 : i32
    %c0_i32_1 = arith.constant 0 : i32
    return %c0_i32, %c0_i32_0 : i32, i32
  }
  func.func @transform_3(%arg0: i32, %arg1: i32) -> (i32, i32) {
    %c0_i32 = arith.constant 0 : i32
    %c0_i32_0 = arith.constant 0 : i32
    %c0_i32_1 = arith.constant 0 : i32
    return %c0_i32, %c0_i32_0 : i32, i32
  }
  func.func @transform_4(%arg0: i32, %arg1: i32) -> (i32, i32) {
    %c0_i32 = arith.constant 0 : i32
    %c0_i32_0 = arith.constant 0 : i32
    %c0_i32_1 = arith.constant 0 : i32
    return %c0_i32, %c0_i32_0 : i32, i32
  }
  func.func @transform_5(%arg0: i32, %arg1: i32) -> (i32, i32) {
    %c0_i32 = arith.constant 0 : i32
    %c0_i32_0 = arith.constant 0 : i32
    return %arg0, %c0_i32 : i32, i32
  }
  func.func @transform_6(%arg0: i32, %arg1: i32) -> (i32, i32) {
    %c0_i32 = arith.constant 0 : i32
    %c0_i32_0 = arith.constant 0 : i32
    return %arg0, %c0_i32 : i32, i32
  }
  func.func @transform_7(%arg0: i32, %arg1: i32) -> (i32, i32) {
    %c0_i32 = arith.constant 0 : i32
    %c0_i32_0 = arith.constant 0 : i32
    return %arg0, %c0_i32 : i32, i32
  }
}

</mosaic_0001>

<llo_original>
// kernel: iic_forward.1
$region0: #{iic_forward.1}
  #allocation0 [shape = 'u32[]', space=smem, size = 0x4, offset = 0x4, fixed_abs, tag = 'smem constant byte address 0x4 - core index']
  #allocation1 [shape = 'u32[72,128]{1,0:T(1,128)}', space=vmem, size = 0x9000, scoped, tag = 'internal scratch']
  #allocation2 [shape = 'f32[2,128]{1,0:T(2,128)}', space=vmem, size = 0x400, scoped, tag = 'scratch operand']
  %s0 = inlined_call_operand.vmem [shape: f32[2,4,256], index: 0, kind: input, shape index: {}]
  %s1 = inlined_call_operand.vmem [shape: f32[4,128], index: 1, kind: input, shape index: {}]
  %s2 = inlined_call_operand.vmem [shape: f32[1,128], index: 2, kind: input, shape index: {}]
  %s3 = inlined_call_operand.vmem [shape: f32[128,256], index: 3, kind: input, shape index: {}]
  %s4 = inlined_call_operand.vmem [shape: f32[1,256], index: 4, kind: input, shape index: {}]
  %s5 = inlined_call_operand.hbm [shape: f32[2,128], index: 5, kind: output, shape index: {0}]
  %s6 = inlined_call_operand.hbm [shape: f32[2,128], index: 6, kind: output, shape index: {1}]
  %s7 = inlined_call_operand.hbm [shape: f32[2,128], index: 7, kind: output, shape index: {2}]
  %8 = xla_tuple %s5, %s6, %s7
  %s9 = sld [smem:[#allocation0]]
  $region54: #{iic_forward.1} parent=0
    _
  %s11 = ssub.s32 1, %s9
  %s12 = scalar_select 0, %s11, %s9
  $region1: #{iic_forward.1} parent=0
    #allocation3 [shape = 'u8[1024]{0}', space=vmem, size = 0x400, scoped, tag = 'output window, operand 0, single buffered']
    #allocation4 [shape = 's32[1]{0}', space=sflag, size = 0x4, scoped, tag = 'scoped memory for iic_forward.1']
    #allocation5 [shape = 'u8[1024]{0}', space=vmem, size = 0x400, scoped, tag = 'output window, operand 1, single buffered']
    #allocation6 [shape = 's32[1]{0}', space=sflag, size = 0x4, scoped, tag = 'scoped memory for iic_forward.1']
    #allocation7 [shape = 'u8[1024]{0}', space=vmem, size = 0x400, scoped, tag = 'output window, operand 2, single buffered']
    %13 = vsyncpa [#allocation4], 0
    %14 = vsyncpa [#allocation6], 0
    // Predicated region
    $region2: #{iic_forward.1} parent=1 // pred_check
      _
    $region3: #{iic_forward.1} parent=1 // pred_check_branch
      %16 = sbr.rel (0) target = $region5
    $region4: #{iic_forward.1} parent=1 // pred_region
      _
    $region5: #{iic_forward.1} parent=1 // pred_fallthru
      _
    // Predicated region
    $region6: #{iic_forward.1} parent=1 // pred_check
      _
    $region7: #{iic_forward.1} parent=1 // pred_check_branch
      %18 = sbr.rel (0) target = $region9
    $region8: #{iic_forward.1} parent=1 // pred_region
      _
    $region9: #{iic_forward.1} parent=1 // pred_fallthru
      _
    // Predicated region
    $region10: #{iic_forward.1} parent=1 // pred_check
      _
    $region11: #{iic_forward.1} parent=1 // pred_check_branch
      %20 = sbr.rel (0) target = $region13
    $region12: #{iic_forward.1} parent=1 // pred_region
      _
    $region13: #{iic_forward.1} parent=1 // pred_fallthru
      _
    // Predicated region
    $region14: #{iic_forward.1} parent=1 // pred_check
      _
    $region15: #{iic_forward.1} parent=1 // pred_check_branch
      %22 = sbr.rel (0) target = $region17
    $region16: #{iic_forward.1} parent=1 // pred_region
      _
    $region17: #{iic_forward.1} parent=1 // pred_fallthru
      _
    // Predicated region
    $region18: #{iic_forward.1} parent=1 // pred_check
      _
    $region19: #{iic_forward.1} parent=1 // pred_check_branch
      %24 = sbr.rel (0) target = $region21
    $region20: #{iic_forward.1} parent=1 // pred_region
      _
    $region21: #{iic_forward.1} parent=1 // pred_fallthru
      _
    %p25 = scmp.eq.s32.totalorder 0, 0
    // Predicated region
    $region22: #{iic_forward.1} parent=1 // pred_check
      %p26 = pneg %p25
    $region23: #{iic_forward.1} parent=1 // pred_check_branch
      %28 = sbr.rel (%p26) target = $region25
    $region24: #{iic_forward.1} parent=1 // pred_region
      %29 = vst [vmem:[#allocation2] sm:$0x3] 0.0
    $region25: #{iic_forward.1} parent=1 // pred_fallthru
      _
    %v30 = vld [vmem:[%s1] sm:$0xf]
    %v31 = vld [vmem:[%s2] sm:$0x1]
    %v32 = vld [vmem:[%s0] sm:$0xff]
    %v34 = vperm.slane %v31, 0
    %37 = vst [vmem:[#allocation1] ss:$2 sm:$0xff] %v32
    %v38 = vld.sshfl [vmem:[#allocation1] sm:$0xff pattern:$0x75316420]
    %v39 = vld.sshfl [vmem:[#allocation1 + $0x8] sm:$0xff pattern:$0x75316420]
    %42 = vxpose.xlu0.b32.start [1/16] %v38, 128
    %43 = vxpose.xlu0.b32.cont [2/16] 0.0, 128
    %44 = vxpose.xlu0.b32.cont [3/16] 0.0, 128
    %45 = vxpose.xlu0.b32.cont [4/16] 0.0, 128
    %46 = vxpose.xlu0.b32.cont [5/16] 0.0, 128
    %47 = vxpose.xlu0.b32.cont [6/16] 0.0, 128
    %48 = vxpose.xlu0.b32.cont [7/16] 0.0, 128
    %49 = vxpose.xlu0.b32.cont [8/16] 0.0, 128
    %50 = vxpose.xlu0.b32.cont [9/16] 0.0, 128
    %51 = vxpose.xlu0.b32.cont [10/16] 0.0, 128
    %52 = vxpose.xlu0.b32.cont [11/16] 0.0, 128
    %53 = vxpose.xlu0.b32.cont [12/16] 0.0, 128
    %54 = vxpose.xlu0.b32.cont [13/16] 0.0, 128
    %55 = vxpose.xlu0.b32.cont [14/16] 0.0, 128
    %56 = vxpose.xlu0.b32.cont [15/16] 0.0, 128
    %57 = vxpose.xlu0.b32.end [16/16] 0.0, 128
    %v58 = vpop.trf.xlu0
    %v59 = vpop.trf.xlu0
    %v60 = vpop.trf.xlu0
    %v61 = vpop.trf.xlu0
    %v62 = vpop.trf.xlu0
    %v63 = vpop.trf.xlu0
    %v64 = vpop.trf.xlu0
    %v65 = vpop.trf.xlu0
    %v66 = vpop.trf.xlu0
    %v67 = vpop.trf.xlu0
    %v68 = vpop.trf.xlu0
    %v69 = vpop.trf.xlu0
    %v70 = vpop.trf.xlu0
    %v71 = vpop.trf.xlu0
    %v72 = vpop.trf.xlu0
    %v73 = vpop.trf.xlu0
    %74 = vxpose.xlu0.b32.start [1/16] %v39, 128
    %75 = vxpose.xlu0.b32.cont [2/16] 0.0, 128
    %76 = vxpose.xlu0.b32.cont [3/16] 0.0, 128
    %77 = vxpose.xlu0.b32.cont [4/16] 0.0, 128
    %78 = vxpose.xlu0.b32.cont [5/16] 0.0, 128
    %79 = vxpose.xlu0.b32.cont [6/16] 0.0, 128
    %80 = vxpose.xlu0.b32.cont [7/16] 0.0, 128
    %81 = vxpose.xlu0.b32.cont [8/16] 0.0, 128
    %82 = vxpose.xlu0.b32.cont [9/16] 0.0, 128
    %83 = vxpose.xlu0.b32.cont [10/16] 0.0, 128
    %84 = vxpose.xlu0.b32.cont [11/16] 0.0, 128
    %85 = vxpose.xlu0.b32.cont [12/16] 0.0, 128
    %86 = vxpose.xlu0.b32.cont [13/16] 0.0, 128
    %87 = vxpose.xlu0.b32.cont [14/16] 0.0, 128
    %88 = vxpose.xlu0.b32.cont [15/16] 0.0, 128
    %89 = vxpose.xlu0.b32.end [16/16] 0.0, 128
    %v90 = vpop.trf.xlu0
    %v91 = vpop.trf.xlu0
    %v92 = vpop.trf.xlu0
    %v93 = vpop.trf.xlu0
    %v94 = vpop.trf.xlu0
    %v95 = vpop.trf.xlu0
    %v96 = vpop.trf.xlu0
    %v97 = vpop.trf.xlu0
    %v98 = vpop.trf.xlu0
    %v99 = vpop.trf.xlu0
    %v100 = vpop.trf.xlu0
    %v101 = vpop.trf.xlu0
    %v102 = vpop.trf.xlu0
    %v103 = vpop.trf.xlu0
    %v104 = vpop.trf.xlu0
    %v105 = vpop.trf.xlu0
    %vm106 = vcmask 31744
    %v108 = vsel %vm106, %v58, 0
    %v111 = vsel %vm106, %v59, 0
    %v114 = vsel %vm106, %v60, 0
    %v117 = vsel %vm106, %v61, 0
    %v120 = vsel %vm106, %v62, 0
    %v123 = vsel %vm106, %v63, 0
    %v126 = vsel %vm106, %v64, 0
    %v129 = vsel %vm106, %v65, 0
    %v132 = vsel %vm106, %v66, 0
    %v135 = vsel %vm106, %v67, 0
    %v138 = vsel %vm106, %v68, 0
    %v141 = vsel %vm106, %v69, 0
    %v144 = vsel %vm106, %v70, 0
    %v147 = vsel %vm106, %v71, 0
    %v150 = vsel %vm106, %v72, 0
    %v153 = vsel %vm106, %v73, 0
    %v156 = vsel %vm106, %v90, 0
    %v159 = vsel %vm106, %v91, 0
    %v162 = vsel %vm106, %v92, 0
    %v165 = vsel %vm106, %v93, 0
    %v168 = vsel %vm106, %v94, 0
    %v171 = vsel %vm106, %v95, 0
    %v174 = vsel %vm106, %v96, 0
    %v177 = vsel %vm106, %v97, 0
    %v180 = vsel %vm106, %v98, 0
    %v183 = vsel %vm106, %v99, 0
    %v186 = vsel %vm106, %v100, 0
    %v189 = vsel %vm106, %v101, 0
    %v192 = vsel %vm106, %v102, 0
    %v195 = vsel %vm106, %v103, 0
    %v198 = vsel %vm106, %v104, 0
    %v201 = vsel %vm106, %v105, 0
    %vm203 = vcmask 1043456
    %v205 = vsel %vm203, %v30, 0
    %207 = vmatpush.msra.mxu0 0.0
    %208 = vmatpush.msra.mxu0 0.0
    %209 = vmatpush.msra.mxu0 0.0
    %210 = vmatpush.msra.mxu0 0.0
    %211 = vmatpush.msra.mxu0 0.0
    %212 = vmatpush.msra.mxu0 0.0
    %213 = vmatpush.msra.mxu0 0.0
    %214 = vmatpush.msra.mxu0 0.0
    %215 = vmatpush.msra.mxu0 0.0
    %216 = vmatpush.msra.mxu0 0.0
    %217 = vmatpush.msra.mxu0 0.0
    %218 = vmatpush.msra.mxu0 0.0
    %219 = vmatpush.msra.mxu0 0.0
    %220 = vmatpush.msra.mxu0 0.0
    %221 = vmatpush.msra.mxu0 0.0
    %222 = vmatpush.msra.mxu0 %v205
    %223 = vmatmul.f32.gmra.mxu0 %v108
    %v224 = vpop.f32.mrf.mxu0
    %v225 = vadd.f32 %v34, %v224
    %226 = vmatmul.f32.gmra.mxu0 %v111
    %v227 = vpop.f32.mrf.mxu0
    %v228 = vadd.f32 %v34, %v227
    %229 = vmatmul.f32.gmra.mxu0 %v114
    %v230 = vpop.f32.mrf.mxu0
    %v231 = vadd.f32 %v34, %v230
    %232 = vmatmul.f32.gmra.mxu0 %v117
    %v233 = vpop.f32.mrf.mxu0
    %v234 = vadd.f32 %v34, %v233
    %235 = vmatmul.f32.gmra.mxu0 %v120
    %v236 = vpop.f32.mrf.mxu0
    %v237 = vadd.f32 %v34, %v236
    %238 = vmatmul.f32.gmra.mxu0 %v123
    %v239 = vpop.f32.mrf.mxu0
    %v240 = vadd.f32 %v34, %v239
    %241 = vmatmul.f32.gmra.mxu0 %v126
    %v242 = vpop.f32.mrf.mxu0
    %v243 = vadd.f32 %v34, %v242
    %244 = vmatmul.f32.gmra.mxu0 %v129
    %v245 = vpop.f32.mrf.mxu0
    %v246 = vadd.f32 %v34, %v245
    %247 = vmatmul.f32.gmra.mxu0 %v132
    %v248 = vpop.f32.mrf.mxu0
    %v249 = vadd.f32 %v34, %v248
    %250 = vmatmul.f32.gmra.mxu0 %v135
    %v251 = vpop.f32.mrf.mxu0
    %v252 = vadd.f32 %v34, %v251
    %253 = vmatmul.f32.gmra.mxu0 %v138
    %v254 = vpop.f32.mrf.mxu0
    %v255 = vadd.f32 %v34, %v254
    %256 = vmatmul.f32.gmra.mxu0 %v141
    %v257 = vpop.f32.mrf.mxu0
    %v258 = vadd.f32 %v34, %v257
    %259 = vmatmul.f32.gmra.mxu0 %v144
    %v260 = vpop.f32.mrf.mxu0
    %v261 = vadd.f32 %v34, %v260
    %262 = vmatmul.f32.gmra.mxu0 %v147
    %v263 = vpop.f32.mrf.mxu0
    %v264 = vadd.f32 %v34, %v263
    %265 = vmatmul.f32.gmra.mxu0 %v150
    %v266 = vpop.f32.mrf.mxu0
    %v267 = vadd.f32 %v34, %v266
    %268 = vmatmul.f32.gmra.mxu0 %v153
    %v269 = vpop.f32.mrf.mxu0
    %v270 = vadd.f32 %v34, %v269
    %271 = vmatmul.f32.gmra.mxu0 %v156
    %v272 = vpop.f32.mrf.mxu0
    %v273 = vadd.f32 %v34, %v272
    %274 = vmatmul.f32.gmra.mxu0 %v159
    %v275 = vpop.f32.mrf.mxu0
    %v276 = vadd.f32 %v34, %v275
    %277 = vmatmul.f32.gmra.mxu0 %v162
    %v278 = vpop.f32.mrf.mxu0
    %v279 = vadd.f32 %v34, %v278
    %280 = vmatmul.f32.gmra.mxu0 %v165
    %v281 = vpop.f32.mrf.mxu0
    %v282 = vadd.f32 %v34, %v281
    %283 = vmatmul.f32.gmra.mxu0 %v168
    %v284 = vpop.f32.mrf.mxu0
    %v285 = vadd.f32 %v34, %v284
    %286 = vmatmul.f32.gmra.mxu0 %v171
    %v287 = vpop.f32.mrf.mxu0
    %v288 = vadd.f32 %v34, %v287
    %289 = vmatmul.f32.gmra.mxu0 %v174
    %v290 = vpop.f32.mrf.mxu0
    %v291 = vadd.f32 %v34, %v290
    %292 = vmatmul.f32.gmra.mxu0 %v177
    %v293 = vpop.f32.mrf.mxu0
    %v294 = vadd.f32 %v34, %v293
    %295 = vmatmul.f32.gmra.mxu0 %v180
    %v296 = vpop.f32.mrf.mxu0
    %v297 = vadd.f32 %v34, %v296
    %298 = vmatmul.f32.gmra.mxu0 %v183
    %v299 = vpop.f32.mrf.mxu0
    %v300 = vadd.f32 %v34, %v299
    %301 = vmatmul.f32.gmra.mxu0 %v186
    %v302 = vpop.f32.mrf.mxu0
    %v303 = vadd.f32 %v34, %v302
    %304 = vmatmul.f32.gmra.mxu0 %v189
    %v305 = vpop.f32.mrf.mxu0
    %v306 = vadd.f32 %v34, %v305
    %307 = vmatmul.f32.gmra.mxu0 %v192
    %v308 = vpop.f32.mrf.mxu0
    %v309 = vadd.f32 %v34, %v308
    %310 = vmatmul.f32.gmra.mxu0 %v195
    %v311 = vpop.f32.mrf.mxu0
    %v312 = vadd.f32 %v34, %v311
    %313 = vmatmul.f32.gmra.mxu0 %v198
    %v314 = vpop.f32.mrf.mxu0
    %v315 = vadd.f32 %v34, %v314
    %316 = vmatmul.f32.gmra.mxu0 %v201
    %v317 = vpop.f32.mrf.mxu0
    %v318 = vadd.f32 %v34, %v317
    %319 = vdwg.mxu0
    %v320 = vmax.f32 %v225, 0.0
    %v321 = vmax.f32 %v228, 0.0
    %v322 = vmax.f32 %v231, 0.0
    %v323 = vmax.f32 %v234, 0.0
    %v324 = vmax.f32 %v237, 0.0
    %v325 = vmax.f32 %v240, 0.0
    %v326 = vmax.f32 %v243, 0.0
    %v327 = vmax.f32 %v246, 0.0
    %v328 = vmax.f32 %v249, 0.0
    %v329 = vmax.f32 %v252, 0.0
    %v330 = vmax.f32 %v255, 0.0
    %v331 = vmax.f32 %v258, 0.0
    %v332 = vmax.f32 %v261, 0.0
    %v333 = vmax.f32 %v264, 0.0
    %v334 = vmax.f32 %v267, 0.0
    %v335 = vmax.f32 %v270, 0.0
    %v336 = vmax.f32 %v273, 0.0
    %v337 = vmax.f32 %v276, 0.0
    %v338 = vmax.f32 %v279, 0.0
    %v339 = vmax.f32 %v282, 0.0
    %v340 = vmax.f32 %v285, 0.0
    %v341 = vmax.f32 %v288, 0.0
    %v342 = vmax.f32 %v291, 0.0
    %v343 = vmax.f32 %v294, 0.0
    %v344 = vmax.f32 %v297, 0.0
    %v345 = vmax.f32 %v300, 0.0
    %v346 = vmax.f32 %v303, 0.0
    %v347 = vmax.f32 %v306, 0.0
    %v348 = vmax.f32 %v309, 0.0
    %v349 = vmax.f32 %v312, 0.0
    %v350 = vmax.f32 %v315, 0.0
    %v351 = vmax.f32 %v318, 0.0
    %v352 = vld [vmem:[#allocation2] sm:$0x1]
    %v353 = vadd.f32 %v320, %v321
    %v354 = vadd.f32 %v353, %v322
    %v355 = vadd.f32 %v354, %v323
    %v356 = vadd.f32 %v355, %v324
    %v357 = vadd.f32 %v356, %v325
    %v358 = vadd.f32 %v357, %v326
    %v359 = vadd.f32 %v358, %v327
    %v360 = vadd.f32 %v359, %v328
    %v361 = vadd.f32 %v360, %v329
    %v362 = vadd.f32 %v361, %v330
    %v363 = vadd.f32 %v362, %v331
    %v364 = vadd.f32 %v363, %v332
    %v365 = vadd.f32 %v364, %v333
    %v366 = vadd.f32 %v365, %v334
    %v367 = vadd.f32 %v366, %v335
    %v368 = vadd.f32 %v367, %v336
    %v369 = vadd.f32 %v368, %v337
    %v370 = vadd.f32 %v369, %v338
    %v371 = vadd.f32 %v370, %v339
    %v372 = vadd.f32 %v371, %v340
    %v373 = vadd.f32 %v372, %v341
    %v374 = vadd.f32 %v373, %v342
    %v375 = vadd.f32 %v374, %v343
    %v376 = vadd.f32 %v375, %v344
    %v377 = vadd.f32 %v376, %v345
    %v378 = vadd.f32 %v377, %v346
    %v379 = vadd.f32 %v378, %v347
    %v380 = vadd.f32 %v379, %v348
    %v381 = vadd.f32 %v380, %v349
    %v382 = vadd.f32 %v381, %v350
    %v383 = vadd.f32 %v382, %v351
    %v384 = vrot.slane %v383, 4
    %v385 = vadd.f32 %v383, %v384
    %v386 = vrot.slane %v385, 2
    %v387 = vadd.f32 %v385, %v386
    %v388 = vrot.slane %v387, 1
    %v389 = vadd.f32 %v387, %v388
    %v390 = vadd.f32 %v352, %v389
    %391 = vst [vmem:[#allocation2] sm:$0x1] %v390
    %s392 = scalar_lea.vmem %s0, 8
    %v393 = vld [vmem:[%s392] sm:$0xff]
    %395 = vst [vmem:[#allocation1] ss:$2 sm:$0xff] %v393
    %v396 = vld.sshfl [vmem:[#allocation1] sm:$0xff pattern:$0x75316420]
    %v397 = vld.sshfl [vmem:[#allocation1 + $0x8] sm:$0xff pattern:$0x75316420]
    %400 = vxpose.xlu0.b32.start [1/16] %v396, 128
    %401 = vxpose.xlu0.b32.cont [2/16] 0.0, 128
    %402 = vxpose.xlu0.b32.cont [3/16] 0.0, 128
    %403 = vxpose.xlu0.b32.cont [4/16] 0.0, 128
    %404 = vxpose.xlu0.b32.cont [5/16] 0.0, 128
    %405 = vxpose.xlu0.b32.cont [6/16] 0.0, 128
    %406 = vxpose.xlu0.b32.cont [7/16] 0.0, 128
    %407 = vxpose.xlu0.b32.cont [8/16] 0.0, 128
    %408 = vxpose.xlu0.b32.cont [9/16] 0.0, 128
    %409 = vxpose.xlu0.b32.cont [10/16] 0.0, 128
    %410 = vxpose.xlu0.b32.cont [11/16] 0.0, 128
    %411 = vxpose.xlu0.b32.cont [12/16] 0.0, 128
    %412 = vxpose.xlu0.b32.cont [13/16] 0.0, 128
    %413 = vxpose.xlu0.b32.cont [14/16] 0.0, 128
    %414 = vxpose.xlu0.b32.cont [15/16] 0.0, 128
    %415 = vxpose.xlu0.b32.end [16/16] 0.0, 128
    %v416 = vpop.trf.xlu0
    %v417 = vpop.trf.xlu0
    %v418 = vpop.trf.xlu0
    %v419 = vpop.trf.xlu0
    %v420 = vpop.trf.xlu0
    %v421 = vpop.trf.xlu0
    %v422 = vpop.trf.xlu0
    %v423 = vpop.trf.xlu0
    %v424 = vpop.trf.xlu0
    %v425 = vpop.trf.xlu0
    %v426 = vpop.trf.xlu0
    %v427 = vpop.trf.xlu0
    %v428 = vpop.trf.xlu0
    %v429 = vpop.trf.xlu0
    %v430 = vpop.trf.xlu0
    %v431 = vpop.trf.xlu0
    %432 = vxpose.xlu0.b32.start [1/16] %v397, 128
    %433 = vxpose.xlu0.b32.cont [2/16] 0.0, 128
    %434 = vxpose.xlu0.b32.cont [3/16] 0.0, 128
    %435 = vxpose.xlu0.b32.cont [4/16] 0.0, 128
    %436 = vxpose.xlu0.b32.cont [5/16] 0.0, 128
    %437 = vxpose.xlu0.b32.cont [6/16] 0.0, 128
    %438 = vxpose.xlu0.b32.cont [7/16] 0.0, 128
    %439 = vxpose.xlu0.b32.cont [8/16] 0.0, 128
    %440 = vxpose.xlu0.b32.cont [9/16] 0.0, 128
    %441 = vxpose.xlu0.b32.cont [10/16] 0.0, 128
    %442 = vxpose.xlu0.b32.cont [11/16] 0.0, 128
    %443 = vxpose.xlu0.b32.cont [12/16] 0.0, 128
    %444 = vxpose.xlu0.b32.cont [13/16] 0.0, 128
    %445 = vxpose.xlu0.b32.cont [14/16] 0.0, 128
    %446 = vxpose.xlu0.b32.cont [15/16] 0.0, 128
    %447 = vxpose.xlu0.b32.end [16/16] 0.0, 128
    %v448 = vpop.trf.xlu0
    %v449 = vpop.trf.xlu0
    %v450 = vpop.trf.xlu0
    %v451 = vpop.trf.xlu0
    %v452 = vpop.trf.xlu0
    %v453 = vpop.trf.xlu0
    %v454 = vpop.trf.xlu0
    %v455 = vpop.trf.xlu0
    %v456 = vpop.trf.xlu0
    %v457 = vpop.trf.xlu0
    %v458 = vpop.trf.xlu0
    %v459 = vpop.trf.xlu0
    %v460 = vpop.trf.xlu0
    %v461 = vpop.trf.xlu0
    %v462 = vpop.trf.xlu0
    %v463 = vpop.trf.xlu0
    %v465 = vsel %vm106, %v416, 0
    %v468 = vsel %vm106, %v417, 0
    %v471 = vsel %vm106, %v418, 0
    %v474 = vsel %vm106, %v419, 0
    %v477 = vsel %vm106, %v420, 0
    %v480 = vsel %vm106, %v421, 0
    %v483 = vsel %vm106, %v422, 0
    %v486 = vsel %vm106, %v423, 0
    %v489 = vsel %vm106, %v424, 0
    %v492 = vsel %vm106, %v425, 0
    %v495 = vsel %vm106, %v426, 0
    %v498 = vsel %vm106, %v427, 0
    %v501 = vsel %vm106, %v428, 0
    %v504 = vsel %vm106, %v429, 0
    %v507 = vsel %vm106, %v430, 0
    %v510 = vsel %vm106, %v431, 0
    %v513 = vsel %vm106, %v448, 0
    %v516 = vsel %vm106, %v449, 0
    %v519 = vsel %vm106, %v450, 0
    %v522 = vsel %vm106, %v451, 0
    %v525 = vsel %vm106, %v452, 0
    %v528 = vsel %vm106, %v453, 0
    %v531 = vsel %vm106, %v454, 0
    %v534 = vsel %vm106, %v455, 0
    %v537 = vsel %vm106, %v456, 0
    %v540 = vsel %vm106, %v457, 0
    %v543 = vsel %vm106, %v458, 0
    %v546 = vsel %vm106, %v459, 0
    %v549 = vsel %vm106, %v460, 0
    %v552 = vsel %vm106, %v461, 0
    %v555 = vsel %vm106, %v462, 0
    %v558 = vsel %vm106, %v463, 0
    %560 = vmatpush.msra.mxu0 0.0
    %561 = vmatpush.msra.mxu0 0.0
    %562 = vmatpush.msra.mxu0 0.0
    %563 = vmatpush.msra.mxu0 0.0
    %564 = vmatpush.msra.mxu0 0.0
    %565 = vmatpush.msra.mxu0 0.0
    %566 = vmatpush.msra.mxu0 0.0
    %567 = vmatpush.msra.mxu0 0.0
    %568 = vmatpush.msra.mxu0 0.0
    %569 = vmatpush.msra.mxu0 0.0
    %570 = vmatpush.msra.mxu0 0.0
    %571 = vmatpush.msra.mxu0 0.0
    %572 = vmatpush.msra.mxu0 0.0
    %573 = vmatpush.msra.mxu0 0.0
    %574 = vmatpush.msra.mxu0 0.0
    %575 = vmatpush.msra.mxu0 %v205
    %576 = vmatmul.f32.gmra.mxu0 %v465
    %v577 = vpop.f32.mrf.mxu0
    %v578 = vadd.f32 %v34, %v577
    %579 = vmatmul.f32.gmra.mxu0 %v468
    %v580 = vpop.f32.mrf.mxu0
    %v581 = vadd.f32 %v34, %v580
    %582 = vmatmul.f32.gmra.mxu0 %v471
    %v583 = vpop.f32.mrf.mxu0
    %v584 = vadd.f32 %v34, %v583
    %585 = vmatmul.f32.gmra.mxu0 %v474
    %v586 = vpop.f32.mrf.mxu0
    %v587 = vadd.f32 %v34, %v586
    %588 = vmatmul.f32.gmra.mxu0 %v477
    %v589 = vpop.f32.mrf.mxu0
    %v590 = vadd.f32 %v34, %v589
    %591 = vmatmul.f32.gmra.mxu0 %v480
    %v592 = vpop.f32.mrf.mxu0
    %v593 = vadd.f32 %v34, %v592
    %594 = vmatmul.f32.gmra.mxu0 %v483
    %v595 = vpop.f32.mrf.mxu0
    %v596 = vadd.f32 %v34, %v595
    %597 = vmatmul.f32.gmra.mxu0 %v486
    %v598 = vpop.f32.mrf.mxu0
    %v599 = vadd.f32 %v34, %v598
    %600 = vmatmul.f32.gmra.mxu0 %v489
    %v601 = vpop.f32.mrf.mxu0
    %v602 = vadd.f32 %v34, %v601
    %603 = vmatmul.f32.gmra.mxu0 %v492
    %v604 = vpop.f32.mrf.mxu0
    %v605 = vadd.f32 %v34, %v604
    %606 = vmatmul.f32.gmra.mxu0 %v495
    %v607 = vpop.f32.mrf.mxu0
    %v608 = vadd.f32 %v34, %v607
    %609 = vmatmul.f32.gmra.mxu0 %v498
    %v610 = vpop.f32.mrf.mxu0
    %v611 = vadd.f32 %v34, %v610
    %612 = vmatmul.f32.gmra.mxu0 %v501
    %v613 = vpop.f32.mrf.mxu0
    %v614 = vadd.f32 %v34, %v613
    %615 = vmatmul.f32.gmra.mxu0 %v504
    %v616 = vpop.f32.mrf.mxu0
    %v617 = vadd.f32 %v34, %v616
    %618 = vmatmul.f32.gmra.mxu0 %v507
    %v619 = vpop.f32.mrf.mxu0
    %v620 = vadd.f32 %v34, %v619
    %621 = vmatmul.f32.gmra.mxu0 %v510
    %v622 = vpop.f32.mrf.mxu0
    %v623 = vadd.f32 %v34, %v622
    %624 = vmatmul.f32.gmra.mxu0 %v513
    %v625 = vpop.f32.mrf.mxu0
    %v626 = vadd.f32 %v34, %v625
    %627 = vmatmul.f32.gmra.mxu0 %v516
    %v628 = vpop.f32.mrf.mxu0
    %v629 = vadd.f32 %v34, %v628
    %630 = vmatmul.f32.gmra.mxu0 %v519
    %v631 = vpop.f32.mrf.mxu0
    %v632 = vadd.f32 %v34, %v631
    %633 = vmatmul.f32.gmra.mxu0 %v522
    %v634 = vpop.f32.mrf.mxu0
    %v635 = vadd.f32 %v34, %v634
    %636 = vmatmul.f32.gmra.mxu0 %v525
    %v637 = vpop.f32.mrf.mxu0
    %v638 = vadd.f32 %v34, %v637
    %639 = vmatmul.f32.gmra.mxu0 %v528
    %v640 = vpop.f32.mrf.mxu0
    %v641 = vadd.f32 %v34, %v640
    %642 = vmatmul.f32.gmra.mxu0 %v531
    %v643 = vpop.f32.mrf.mxu0
    %v644 = vadd.f32 %v34, %v643
    %645 = vmatmul.f32.gmra.mxu0 %v534
    %v646 = vpop.f32.mrf.mxu0
    %v647 = vadd.f32 %v34, %v646
    %648 = vmatmul.f32.gmra.mxu0 %v537
    %v649 = vpop.f32.mrf.mxu0
    %v650 = vadd.f32 %v34, %v649
    %651 = vmatmul.f32.gmra.mxu0 %v540
    %v652 = vpop.f32.mrf.mxu0
    %v653 = vadd.f32 %v34, %v652
    %654 = vmatmul.f32.gmra.mxu0 %v543
    %v655 = vpop.f32.mrf.mxu0
    %v656 = vadd.f32 %v34, %v655
    %657 = vmatmul.f32.gmra.mxu0 %v546
    %v658 = vpop.f32.mrf.mxu0
    %v659 = vadd.f32 %v34, %v658
    %660 = vmatmul.f32.gmra.mxu0 %v549
    %v661 = vpop.f32.mrf.mxu0
    %v662 = vadd.f32 %v34, %v661
    %663 = vmatmul.f32.gmra.mxu0 %v552
    %v664 = vpop.f32.mrf.mxu0
    %v665 = vadd.f32 %v34, %v664
    %666 = vmatmul.f32.gmra.mxu0 %v555
    %v667 = vpop.f32.mrf.mxu0
    %v668 = vadd.f32 %v34, %v667
    %669 = vmatmul.f32.gmra.mxu0 %v558
    %v670 = vpop.f32.mrf.mxu0
    %v671 = vadd.f32 %v34, %v670
    %672 = vdwg.mxu0
    %v673 = vmax.f32 %v578, 0.0
    %v674 = vmax.f32 %v581, 0.0
    %v675 = vmax.f32 %v584, 0.0
    %v676 = vmax.f32 %v587, 0.0
    %v677 = vmax.f32 %v590, 0.0
    %v678 = vmax.f32 %v593, 0.0
    %v679 = vmax.f32 %v596, 0.0
    %v680 = vmax.f32 %v599, 0.0
    %v681 = vmax.f32 %v602, 0.0
    %v682 = vmax.f32 %v605, 0.0
    %v683 = vmax.f32 %v608, 0.0
    %v684 = vmax.f32 %v611, 0.0
    %v685 = vmax.f32 %v614, 0.0
    %v686 = vmax.f32 %v617, 0.0
    %v687 = vmax.f32 %v620, 0.0
    %v688 = vmax.f32 %v623, 0.0
    %v689 = vmax.f32 %v626, 0.0
    %v690 = vmax.f32 %v629, 0.0
    %v691 = vmax.f32 %v632, 0.0
    %v692 = vmax.f32 %v635, 0.0
    %v693 = vmax.f32 %v638, 0.0
    %v694 = vmax.f32 %v641, 0.0
    %v695 = vmax.f32 %v644, 0.0
    %v696 = vmax.f32 %v647, 0.0
    %v697 = vmax.f32 %v650, 0.0
    %v698 = vmax.f32 %v653, 0.0
    %v699 = vmax.f32 %v656, 0.0
    %v700 = vmax.f32 %v659, 0.0
    %v701 = vmax.f32 %v662, 0.0
    %v702 = vmax.f32 %v665, 0.0
    %v703 = vmax.f32 %v668, 0.0
    %v704 = vmax.f32 %v671, 0.0
    %v705 = vld [vmem:[#allocation2 + $0x1] sm:$0x1]
    %v706 = vadd.f32 %v673, %v674
    %v707 = vadd.f32 %v706, %v675
    %v708 = vadd.f32 %v707, %v676
    %v709 = vadd.f32 %v708, %v677
    %v710 = vadd.f32 %v709, %v678
    %v711 = vadd.f32 %v710, %v679
    %v712 = vadd.f32 %v711, %v680
    %v713 = vadd.f32 %v712, %v681
    %v714 = vadd.f32 %v713, %v682
    %v715 = vadd.f32 %v714, %v683
    %v716 = vadd.f32 %v715, %v684
    %v717 = vadd.f32 %v716, %v685
    %v718 = vadd.f32 %v717, %v686
    %v719 = vadd.f32 %v718, %v687
    %v720 = vadd.f32 %v719, %v688
    %v721 = vadd.f32 %v720, %v689
    %v722 = vadd.f32 %v721, %v690
    %v723 = vadd.f32 %v722, %v691
    %v724 = vadd.f32 %v723, %v692
    %v725 = vadd.f32 %v724, %v693
    %v726 = vadd.f32 %v725, %v694
    %v727 = vadd.f32 %v726, %v695
    %v728 = vadd.f32 %v727, %v696
    %v729 = vadd.f32 %v728, %v697
    %v730 = vadd.f32 %v729, %v698
    %v731 = vadd.f32 %v730, %v699
    %v732 = vadd.f32 %v731, %v700
    %v733 = vadd.f32 %v732, %v701
    %v734 = vadd.f32 %v733, %v702
    %v735 = vadd.f32 %v734, %v703
    %v736 = vadd.f32 %v735, %v704
    %v737 = vrot.slane %v736, 4
    %v738 = vadd.f32 %v736, %v737
    %v739 = vrot.slane %v738, 2
    %v740 = vadd.f32 %v738, %v739
    %v741 = vrot.slane %v740, 1
    %v742 = vadd.f32 %v740, %v741
    %v743 = vadd.f32 %v705, %v742
    %744 = vst [vmem:[#allocation2 + $0x1] sm:$0x1] %v743
    // Predicated region
    $region26: #{iic_forward.1} parent=1 // pred_check
      %p745 = pneg %p25
    $region27: #{iic_forward.1} parent=1 // pred_check_branch
      %747 = sbr.rel (%p745) target = $region29
    $region28: #{iic_forward.1} parent=1 // pred_region
      %v748 = vld [vmem:[#allocation2] sm:$0x3]
      %v749 = vmul.f32 %v748, 0.00390625
      %750 = vst [vmem:[#allocation7] sm:$0x3] %v749
      %v751 = vld [vmem:[%s3] sm:$0xff]
      %v752 = vld [vmem:[%s3 + $0x8] sm:$0xff]
      %v753 = vld [vmem:[%s3 + $0x10] sm:$0xff]
      %v754 = vld [vmem:[%s3 + $0x18] sm:$0xff]
      %v755 = vld [vmem:[%s3 + $0x20] sm:$0xff]
      %v756 = vld [vmem:[%s3 + $0x28] sm:$0xff]
      %v757 = vld [vmem:[%s3 + $0x30] sm:$0xff]
      %v758 = vld [vmem:[%s3 + $0x38] sm:$0xff]
      %v759 = vld [vmem:[%s3 + $0x40] sm:$0xff]
      %v760 = vld [vmem:[%s3 + $0x48] sm:$0xff]
      %v761 = vld [vmem:[%s3 + $0x50] sm:$0xff]
      %v762 = vld [vmem:[%s3 + $0x58] sm:$0xff]
      %v763 = vld [vmem:[%s3 + $0x60] sm:$0xff]
      %v764 = vld [vmem:[%s3 + $0x68] sm:$0xff]
      %v765 = vld [vmem:[%s3 + $0x70] sm:$0xff]
      %v766 = vld [vmem:[%s3 + $0x78] sm:$0xff]
      %v767 = vld [vmem:[%s3 + $0x80] sm:$0xff]
      %v768 = vld [vmem:[%s3 + $0x88] sm:$0xff]
      %v769 = vld [vmem:[%s3 + $0x90] sm:$0xff]
      %v770 = vld [vmem:[%s3 + $0x98] sm:$0xff]
      %v771 = vld [vmem:[%s3 + $0xa0] sm:$0xff]
      %v772 = vld [vmem:[%s3 + $0xa8] sm:$0xff]
      %v773 = vld [vmem:[%s3 + $0xb0] sm:$0xff]
      %v774 = vld [vmem:[%s3 + $0xb8] sm:$0xff]
      %v775 = vld [vmem:[%s3 + $0xc0] sm:$0xff]
      %v776 = vld [vmem:[%s3 + $0xc8] sm:$0xff]
      %v777 = vld [vmem:[%s3 + $0xd0] sm:$0xff]
      %v778 = vld [vmem:[%s3 + $0xd8] sm:$0xff]
      %v779 = vld [vmem:[%s3 + $0xe0] sm:$0xff]
      %v780 = vld [vmem:[%s3 + $0xe8] sm:$0xff]
      %v781 = vld [vmem:[%s3 + $0xf0] sm:$0xff]
      %v782 = vld [vmem:[%s3 + $0xf8] sm:$0xff]
      %v783 = vld [vmem:[%s4] sm:$0x3]
      %v785 = vperm.slane %v783, 0
      %v786 = vperm.slane %v783, 1
      %789 = vmatpush.msra.mxu0 %v781
      %790 = vmatpush.msra.mxu0 %v779
      %791 = vmatpush.msra.mxu0 %v777
      %792 = vmatpush.msra.mxu0 %v775
      %793 = vmatpush.msra.mxu0 %v773
      %794 = vmatpush.msra.mxu0 %v771
      %795 = vmatpush.msra.mxu0 %v769
      %796 = vmatpush.msra.mxu0 %v767
      %797 = vmatpush.msra.mxu0 %v765
      %798 = vmatpush.msra.mxu0 %v763
      %799 = vmatpush.msra.mxu0 %v761
      %800 = vmatpush.msra.mxu0 %v759
      %801 = vmatpush.msra.mxu0 %v757
      %802 = vmatpush.msra.mxu0 %v755
      %803 = vmatpush.msra.mxu0 %v753
      %804 = vmatpush.msra.mxu0 %v751
      %805 = vmatmul.f32.gmra.mxu0 %v749
      %v806 = vpop.f32.mrf.mxu0
      %v807 = vadd.f32 %v785, %v806
      %808 = vdwg.mxu0
      %809 = vmatpush.msra.mxu0 %v782
      %810 = vmatpush.msra.mxu0 %v780
      %811 = vmatpush.msra.mxu0 %v778
      %812 = vmatpush.msra.mxu0 %v776
      %813 = vmatpush.msra.mxu0 %v774
      %814 = vmatpush.msra.mxu0 %v772
      %815 = vmatpush.msra.mxu0 %v770
      %816 = vmatpush.msra.mxu0 %v768
      %817 = vmatpush.msra.mxu0 %v766
      %818 = vmatpush.msra.mxu0 %v764
      %819 = vmatpush.msra.mxu0 %v762
      %820 = vmatpush.msra.mxu0 %v760
      %821 = vmatpush.msra.mxu0 %v758
      %822 = vmatpush.msra.mxu0 %v756
      %823 = vmatpush.msra.mxu0 %v754
      %824 = vmatpush.msra.mxu0 %v752
      %825 = vmatmul.f32.gmra.mxu0 %v749
      %v826 = vpop.f32.mrf.mxu0
      %v827 = vadd.f32 %v786, %v826
      %828 = vdwg.mxu0
      %v829 = vlaneseq
      %v830 = vand.u32 %v829, 127
      %vm831 = vcmp.lt.s32.totalorder %v830, 5
      %v832 = vsel %vm831, %v807, -1e+30
      %vm833 = vcmask 1041408
      %v834 = vsel %vm833, %v832, -inf
      %835 = vmax.xlane.f32.xlu0 %v834
      %v836 = vpop.xlane.xlu0 %835
      %v837 = vsub.f32 %v832, %v836
      %v838 = vmul.f32 %v837, 1.442695
      %v839 = vpow.pop %v838
      %v840 = vsel %vm833, %v839, 0.0
      %841 = vadd.xlane.f32.xlu0 %v840
      %v842 = vpop.xlane.xlu0 %841
      %v843 = vrcp.pop %v842
      %v844 = vmul.f32 %v842, %v843
      %v845 = vsub.f32 1.0, %v844
      %v846 = vmul.f32 %v843, %v845
      %v847 = vadd.f32 %v843, %v846
      %vm848 = vweird.f32 %v842
      %vm849 = vweird.f32 %v843
      %vm850 = vmor %vm848, %vm849
      %v851 = vsel %vm850, %v843, %v847
      %v852 = vand.u32 2147483647, %v842
      %vm853 = vcmp.eq.f32.partialorder %v852, 8.507059e+37
      %v854 = vand.u32 %v842, 2147483648
      %v855 = vor.u32 1.1754944e-38, %v854
      %v856 = vsel %vm853, %v855, %v851
      %v857 = vmul.f32 %v839, %v856
      %vm858 = vcmp.lt.s32.totalorder %v830, 8
      %v859 = vsel %vm858, %v827, -1e+30
      %v860 = vsel %vm833, %v859, -inf
      %861 = vmax.xlane.f32.xlu0 %v860
      %v862 = vpop.xlane.xlu0 %861
      %v863 = vsub.f32 %v859, %v862
      %v864 = vmul.f32 %v863, 1.442695
      %v865 = vpow.pop %v864
      %v866 = vsel %vm833, %v865, 0.0
      %867 = vadd.xlane.f32.xlu0 %v866
      %v868 = vpop.xlane.xlu0 %867
      %v869 = vrcp.pop %v868
      %v870 = vmul.f32 %v868, %v869
      %v871 = vsub.f32 1.0, %v870
      %v872 = vmul.f32 %v869, %v871
      %v873 = vadd.f32 %v869, %v872
      %vm874 = vweird.f32 %v868
      %vm875 = vweird.f32 %v869
      %vm876 = vmor %vm874, %vm875
      %v877 = vsel %vm876, %v869, %v873
      %v878 = vand.u32 2147483647, %v868
      %vm879 = vcmp.eq.f32.partialorder %v878, 8.507059e+37
      %v880 = vand.u32 %v868, 2147483648
      %v881 = vor.u32 1.1754944e-38, %v880
      %v882 = vsel %vm879, %v881, %v877
      %v883 = vmul.f32 %v865, %v882
      %884 = vst [vmem:[#allocation3] sm:$0x3] %v857
      %885 = vst [vmem:[#allocation5] sm:$0x3] %v883
    $region29: #{iic_forward.1} parent=1 // pred_fallthru
      _
    // Predicated region
    $region30: #{iic_forward.1} parent=1 // pred_check
      _
    $region31: #{iic_forward.1} parent=1 // pred_check_branch
      %887 = sbr.rel (0) target = $region33
    $region32: #{iic_forward.1} parent=1 // pred_region
      %889 = vsyncadd [#allocation4], 0
      %s891 = sshll.u32 [#allocation3], 4
      %s892 = int_to_ptr.vmem [resolvable:$true] %s891
      %s893 = sshll.u32 %s5, 4
      %s894 = int_to_ptr.hbm [resolvable:$true] %s893
      %896 = dma.vmem_to_hbm [thread:$0]  %s892, 32, %s894, [#allocation4]
    $region33: #{iic_forward.1} parent=1 // pred_fallthru
      _
    // Predicated region
    $region34: #{iic_forward.1} parent=1 // pred_check
      _
    $region35: #{iic_forward.1} parent=1 // pred_check_branch
      %898 = sbr.rel (0) target = $region37
    $region36: #{iic_forward.1} parent=1 // pred_region
      %900 = vsyncadd [#allocation6], 0
      %s902 = sshll.u32 [#allocation5], 4
      %s903 = int_to_ptr.vmem [resolvable:$true] %s902
      %s904 = sshll.u32 %s6, 4
      %s905 = int_to_ptr.hbm [resolvable:$true] %s904
      %907 = dma.vmem_to_hbm [thread:$0]  %s903, 32, %s905, [#allocation6]
    $region37: #{iic_forward.1} parent=1 // pred_fallthru
      _
    // Predicated region
    $region38: #{iic_forward.1} parent=1 // pred_check
      _
    $region39: #{iic_forward.1} parent=1 // pred_check_branch
      %909 = sbr.rel (0) target = $region41
    $region40: #{iic_forward.1} parent=1 // pred_region
      %911 = vsyncadd [#allocation6], 0
      %s913 = sshll.u32 [#allocation7], 4
      %s914 = int_to_ptr.vmem [resolvable:$true] %s913
      %s915 = sshll.u32 %s7, 4
      %s916 = int_to_ptr.hbm [resolvable:$true] %s915
      %918 = dma.vmem_to_hbm [thread:$0]  %s914, 32, %s916, [#allocation6]
    $region41: #{iic_forward.1} parent=1 // pred_fallthru
      _
    // Predicated region
    $region42: #{iic_forward.1} parent=1 // pred_check
      _
    $region43: #{iic_forward.1} parent=1 // pred_check_branch
      %920 = sbr.rel (0) target = $region45
    $region44: #{iic_forward.1} parent=1 // pred_region
      %922 = dma.done [#allocation4], 32
    $region45: #{iic_forward.1} parent=1 // pred_fallthru
      _
    // Predicated region
    $region46: #{iic_forward.1} parent=1 // pred_check
      _
    $region47: #{iic_forward.1} parent=1 // pred_check_branch
      %924 = sbr.rel (0) target = $region49
    $region48: #{iic_forward.1} parent=1 // pred_region
      %926 = dma.done [#allocation6], 32
    $region49: #{iic_forward.1} parent=1 // pred_fallthru
      _
    // Predicated region
    $region50: #{iic_forward.1} parent=1 // pred_check
      _
    $region51: #{iic_forward.1} parent=1 // pred_check_branch
      %928 = sbr.rel (0) target = $region53
    $region52: #{iic_forward.1} parent=1 // pred_region
      %930 = dma.done [#allocation6], 32
    $region53: #{iic_forward.1} parent=1 // pred_fallthru
      _
    %931 = vsyncpa [#allocation4], 1
    %932 = vsyncpa [#allocation6], 1

</llo_original>
